<compile_context>
chip_gen: v6e
topology: v6e:2x2x1
jax: 0.10.0
libtpu: 0.0.40
codegen_flags: <defaults>
</compile_context>

<pallas_src>
import functools
import math

import jax
import jax.numpy as jnp
from jax import lax
from jax.experimental import pallas as pl
from jax.experimental.pallas import tpu as pltpu


# --------------------------------------------------------------------------
# Kernel
# --------------------------------------------------------------------------
def _pc_eps_kernel(x_ref, mu_ref, eps_ref, *, tb, td, B, D,
                   mask_rows, mask_cols):
    """eps[b] += sum_d (x[b,d] - mu[b,d])**2 over the current (tb, td) tile."""
    k = pl.program_id(1)  # feature (reduction) axis — last grid axis

    @pl.when(k == 0)
    def _init():
        eps_ref[...] = jnp.zeros_like(eps_ref)

    diff = x_ref[...].astype(jnp.float32) - mu_ref[...].astype(jnp.float32)

    # Ragged-edge masking (compile-time flags; masks are VPU work, free under
    # the HBM roofline).  The column mask is required for correctness when the
    # last D tile reads past D; the row mask only cleans up discarded lanes.
    if mask_cols:
        col = lax.broadcasted_iota(jnp.int32, (tb, td), 1) + k * td
        diff = jnp.where(col < D, diff, 0.0)
    if mask_rows:
        row = lax.broadcasted_iota(jnp.int32, (tb, td), 0) + pl.program_id(0) * tb
        diff = jnp.where(row < B, diff, 0.0)

    # Lane-dense accumulate: batch lives on the 128-wide lane axis of the
    # resident (1, tb) output block (same block index for every k).
    eps_ref[...] += jnp.sum(diff * diff, axis=1)[None, :]


# --------------------------------------------------------------------------
# Tile selection
# --------------------------------------------------------------------------
def _tile_budget_bytes():
    """Per-input, per-step tile budget (bytes), generation aware."""
    try:
        kind = jax.devices()[0].device_kind.lower()
    except Exception:  # no devices / unknown backend — safe default
        return 4 << 20
    if "v5 lite" in kind or "v5lite" in kind or "v5e" in kind:
        return 2 << 20       # 2 in x 2 buf x 2 MiB = 8 MiB, safe under 16 MiB scoped
    if "v7" in kind:
        return 8 << 20       # 3.2 TB/s HBM: amortize the ~0.35 us per-step cost
    return 4 << 20           # v6e / v4 / fallback


def _sublane(itemsize):
    return {4: 8, 2: 16, 1: 32}.get(int(itemsize), 8)


def _pick_tiles(B, D, itemsize, budget, target_steps=8):
    """Choose (tb, td): per-input slab ~budget, lane-aligned, multi-step grid."""
    lane = 128
    # Feature tile: full D unless even 128 rows of full D blow the budget.
    if D <= lane or D * itemsize * lane <= budget:
        td = D
    else:
        td = max(lane, (budget // (lane * itemsize)) // lane * lane)
    # Batch tile from the remaining budget, lane-aligned for dense eps stores.
    rows = max(lane, (budget // max(1, td * itemsize)) // lane * lane)
    # Keep the batch grid multi-step (2-TC sharding on v7x, DMA/compute
    # overlap) but never shrink a tile below ~512 KiB (per-step ~0.35 us).
    floor_rows = max(lane, ((512 << 10) // max(1, td * itemsize)) // lane * lane)
    step_rows = -(-B // target_steps)
    step_rows = -(-step_rows // lane) * lane
    rows = min(rows, max(floor_rows, step_rows))
    tb = B if B <= rows else rows
    return tb, td


def _sanitize_tile(t, full, align):
    """Clamp a user tile to [1, full] and align it when it actually tiles."""
    t = max(1, min(int(t), full))
    if t < full:
        t = max(align, t - (t % align))
        if t >= full:
            t = full
    return t


# --------------------------------------------------------------------------
# Wrapper
# --------------------------------------------------------------------------
def pc_layer_eps(x, mu, *, tb=None, td=None):
    """eps[b] = sum_d (x[b, d] - mu[b, d])**2, via a Pallas TPU kernel.

    Args:
      x:  (B, D) current layer state.
      mu: (B, D) guess coming from the previous layer.
      tb: optional batch-tile override.
      td: optional feature-tile override.
    Returns:
      eps with shape (B,), float32.
    """
    assert x.shape == mu.shape and x.ndim == 2
    B, D = x.shape
    itemsize = jnp.dtype(x.dtype).itemsize
    sub = _sublane(itemsize)

    budget = _tile_budget_bytes()
    auto_tb, auto_td = _pick_tiles(B, D, itemsize, budget)
    tb = auto_tb if tb is None else tb
    td = auto_td if td is None else td

    # Enforce sublane/lane alignment on overrides (avoids relayouts / masked
    # stores); blocks that equal the full dim are always legal.
    tb = _sanitize_tile(tb, B, sub)
    if tb < B and tb >= 128:
        tb -= tb % 128                       # lane-dense (1, tb) eps stores
    td = _sanitize_tile(td, D, 128)

    grid_b = -(-B // tb)                     # ceil-div
    grid_d = -(-D // td)
    mask_rows = (grid_b * tb != B)
    mask_cols = (grid_d * td != D)

    kernel = functools.partial(
        _pc_eps_kernel, tb=tb, td=td, B=B, D=D,
        mask_rows=mask_rows, mask_cols=mask_cols)

    # 2 inputs x 2 pipeline buffers x tile + output + headroom.
    vmem_need = 4 * tb * td * itemsize + 8 * tb * 4 + (2 << 20)
    vmem_limit = int(min(48 << 20, max(32 << 20, vmem_need)))

    eps = pl.pallas_call(
        kernel,
        out_shape=jax.ShapeDtypeStruct((grid_b, tb), jnp.float32),
        grid_spec=pltpu.PrefetchScalarGridSpec(
            num_scalar_prefetch=0,
            grid=(grid_b, grid_d),           # reduction axis (D) last
            in_specs=[
                pl.BlockSpec((tb, td), lambda i, k: (i, k)),
                pl.BlockSpec((tb, td), lambda i, k: (i, k)),
            ],
            out_specs=pl.BlockSpec((1, tb), lambda i, k: (i, 0)),
        ),
        compiler_params=pltpu.CompilerParams(
            dimension_semantics=("parallel", "arbitrary"),
            vmem_limit_bytes=vmem_limit,
        ),
        cost_estimate=pl.CostEstimate(
            flops=3 * B * D,
            bytes_accessed=2 * B * D * itemsize + 4 * B,
            transcendentals=0,
        ),
    )(x, mu)
    return eps.reshape(grid_b * tb)[:B]


# --------------------------------------------------------------------------
# Module port
# --------------------------------------------------------------------------
class PCLayer:
    """JAX/Pallas port of the PyTorch PCLayer module."""

    def __init__(self, size: int) -> None:
        self.size = size
        self.x = None
        self.eps = None

    def init(self, init, mu, key=None, mean=0.0, std=1.0, gain=1.0):
        shape = mu.shape
        if init == "zeros":
            x = jnp.zeros(shape, dtype=mu.dtype)
        elif init == "normal":
            assert key is not None
            x = mean + std * jax.random.normal(key, shape, dtype=jnp.float32)
            x = x.astype(mu.dtype)
        elif init == "xavier_normal":
            assert key is not None
            fan_in, fan_out = shape[1], shape[0]
            xavier_std = gain * math.sqrt(2.0 / (fan_in + fan_out))
            x = (xavier_std * jax.random.normal(key, shape, dtype=jnp.float32)
                 ).astype(mu.dtype)
        elif init == "forward":
            x = mu  # detach/clone is a no-op in functional JAX
        else:
            raise ValueError(f"{init} is not a valid initialization technique!")
        self.x = x

    def forward(self, mu, init=None, key=None, tb=None, td=None):
        if init is not None:
            self.init(init=init, mu=mu, key=key)
        # x is forwarded unchanged (the "detach" semantics); only the
        # prediction error runs on-chip.
        self.eps = pc_layer_eps(self.x, mu, tb=tb, td=td)
        return self.x


def _eps_ref(x, mu):
    return jnp.sum(
        jnp.square(x.astype(jnp.float32) - mu.astype(jnp.float32)), axis=1
    )


if __name__ == "__main__":
    key = jax.random.PRNGKey(0)
    k_mu, k_init, k_mu2, k_x2 = jax.random.split(key, 4)

    # --- Test 1: small FC-style shapes, 'normal' init (auto tiles) ----------
    B, D = 8, 128
    mu = jax.random.normal(k_mu, (B, D), dtype=jnp.float32)

    layer = PCLayer(size=D)
    x_out = jax.block_until_ready(layer.forward(mu, init="normal", key=k_init))
    eps = jax.block_until_ready(layer.eps)
    assert x_out.shape == (B, D)
    assert eps.shape == (B,) and eps.dtype == jnp.float32
    assert jnp.allclose(eps, _eps_ref(layer.x, mu), atol=1e-4, rtol=1e-4)
    assert jnp.allclose(x_out, layer.x)

    # --- Test 2: 'forward' init -> x == mu, eps must be exactly 0 -----------
    x_fwd = jax.block_until_ready(layer.forward(mu, init="forward"))
    eps_fwd = jax.block_until_ready(layer.eps)
    assert jnp.allclose(x_fwd, mu)
    assert jnp.allclose(eps_fwd, jnp.zeros((B,), jnp.float32))

    # --- Test 3: ragged batch AND ragged feature tiles (in-kernel masks) ----
    B2, D2 = 100, 192
    mu2 = jax.random.normal(k_mu2, (B2, D2), dtype=jnp.float32)
    x2 = jax.random.normal(k_x2, (B2, D2), dtype=jnp.float32)
    eps2 = jax.block_until_ready(pc_layer_eps(x2, mu2, tb=32, td=128))
    assert eps2.shape == (B2,)
    assert jnp.allclose(eps2, _eps_ref(x2, mu2), atol=1e-4, rtol=1e-4)

    # --- Test 4: bf16 inputs still accumulate eps in f32 --------------------
    eps_bf16 = jax.block_until_ready(
        pc_layer_eps(x2.astype(jnp.bfloat16), mu2.astype(jnp.bfloat16),
                     tb=32, td=128)
    )
    eps_bf16_ref = _eps_ref(x2.astype(jnp.bfloat16), mu2.astype(jnp.bfloat16))
    assert jnp.allclose(eps_bf16, eps_bf16_ref, atol=1e-2, rtol=1e-2)

    print("KERNEL_OK")
</pallas_src>

<mosaic_0001>
module attributes {stable_mosaic.version = 11 : i64} {
  func.func @_pc_eps_kernel(%arg0: i32, %arg1: i32, %arg2: memref<8x128xf32, #tpu.memory_space<vmem>>, %arg3: memref<8x128xf32, #tpu.memory_space<vmem>>, %arg4: memref<1x8xf32, #tpu.memory_space<vmem>>) attributes {dimension_semantics = [#tpu.dimension_semantics<parallel>, #tpu.dimension_semantics<arbitrary>], iteration_bounds = array<i64: 1, 1>, scalar_prefetch = 0 : i64, scratch_operands = 0 : i64, tpu.core_type = #tpu.core_type<tc>, window_params = [{transform_indices = @transform_0, window_bounds = array<i64: 8, 128>}, {transform_indices = @transform_1, window_bounds = array<i64: 8, 128>}, {transform_indices = @transform_2, window_bounds = array<i64: 1, 8>}]} {
    %c0_i32 = arith.constant 0 : i32
    %0 = arith.cmpi eq, %arg1, %c0_i32 : i32
    %1 = arith.extui %0 : i1 to i32
    %c0_i32_0 = arith.constant 0 : i32
    %2 = arith.cmpi ne, %1, %c0_i32_0 : i32
    scf.if %2 {
      %cst_8 = arith.constant 0.000000e+00 : f32
      %12 = vector.broadcast %cst_8 : f32 to vector<1x8xf32>
      %c0_9 = arith.constant 0 : index
      %c0_10 = arith.constant 0 : index
      %13 = vector.load %arg4[%c0_9, %c0_10] : memref<1x8xf32, #tpu.memory_space<vmem>>, vector<1x8xf32>
      tpu.vector_store %arg4[%c0_9, %c0_10], %12 {strides = array<i32>} : memref<1x8xf32, #tpu.memory_space<vmem>>, vector<1x8xf32>,
    } else {
    }
    %c0 = arith.constant 0 : index
    %c0_1 = arith.constant 0 : index
    %3 = vector.load %arg2[%c0, %c0_1] : memref<8x128xf32, #tpu.memory_space<vmem>>, vector<8x128xf32>
    %c0_2 = arith.constant 0 : index
    %c0_3 = arith.constant 0 : index
    %4 = vector.load %arg3[%c0_2, %c0_3] : memref<8x128xf32, #tpu.memory_space<vmem>>, vector<8x128xf32>
    %5 = arith.subf %3, %4 : vector<8x128xf32>
    %c0_4 = arith.constant 0 : index
    %c0_5 = arith.constant 0 : index
    %6 = vector.load %arg4[%c0_4, %c0_5] : memref<1x8xf32, #tpu.memory_space<vmem>>, vector<1x8xf32>
    %7 = arith.mulf %5, %5 : vector<8x128xf32>
    %cst = arith.constant dense<0.000000e+00> : vector<8xf32>
    %8 = vector.multi_reduction <add>, %7, %cst [1] : vector<8x128xf32> to vector<8xf32>
    %9 = vector.shape_cast %8 : vector<8xf32> to vector<1x8xf32>
    %10 = arith.addf %6, %9 : vector<1x8xf32>
    %c0_6 = arith.constant 0 : index
    %c0_7 = arith.constant 0 : index
    %11 = vector.load %arg4[%c0_6, %c0_7] : memref<1x8xf32, #tpu.memory_space<vmem>>, vector<1x8xf32>
    tpu.vector_store %arg4[%c0_6, %c0_7], %10 {strides = array<i32>} : memref<1x8xf32, #tpu.memory_space<vmem>>, vector<1x8xf32>,
    return
  }
  func.func @transform_0(%arg0: i32, %arg1: i32) -> (i32, i32) {
    %c0_i32 = arith.constant 0 : i32
    return %arg0, %arg1 : i32, i32
  }
  func.func @transform_1(%arg0: i32, %arg1: i32) -> (i32, i32) {
    %c0_i32 = arith.constant 0 : i32
    return %arg0, %arg1 : i32, i32
  }
  func.func @transform_2(%arg0: i32, %arg1: i32) -> (i32, i32) {
    %c0_i32 = arith.constant 0 : i32
    %c0_i32_0 = arith.constant 0 : i32
    return %arg0, %c0_i32 : i32, i32
  }
}

</mosaic_0001>

<llo_original>
// kernel: tpu_custom_call.1
$region0: #{tpu_custom_call.1}
  #allocation0 [shape = 'u32[]', space=smem, size = 0x4, offset = 0x4, fixed_abs, tag = 'smem constant byte address 0x4 - core index']
  #allocation1 [shape = 'u32[144,128]{1,0:T(1,128)}', space=vmem, size = 0x12000, scoped, tag = 'internal scratch']
  %s0 = inlined_call_operand.hbm [shape: f32[8,128], index: 0, kind: input, shape index: {}]
  %s1 = inlined_call_operand.hbm [shape: f32[8,128], index: 1, kind: input, shape index: {}]
  %s2 = inlined_call_operand.hbm [shape: f32[1,8], index: 2, kind: output, shape index: {}]
  %s3 = sld [smem:[#allocation0]]
  $region30: #{tpu_custom_call.1} parent=0
    _
  %s5 = ssub.s32 1, %s3
  %s6 = scalar_select 0, %s5, %s3
  $region1: #{tpu_custom_call.1} parent=0
    #allocation2 [shape = 'u8[4096]{0}', space=vmem, size = 0x1000, scoped, tag = 'input window, operand 0, single buffered']
    #allocation3 [shape = 's32[1]{0}', space=sflag, size = 0x4, scoped, tag = 'scoped memory for tpu_custom_call.1']
    #allocation4 [shape = 's32[1]{0}', space=sflag, size = 0x4, scoped, tag = 'scoped memory for tpu_custom_call.1']
    #allocation5 [shape = 'u8[4096]{0}', space=vmem, size = 0x1000, scoped, tag = 'input window, operand 1, single buffered']
    #allocation6 [shape = 's32[1]{0}', space=sflag, size = 0x4, scoped, tag = 'scoped memory for tpu_custom_call.1']
    #allocation7 [shape = 'u8[512]{0}', space=vmem, size = 0x400, scoped, tag = 'output window, operand 0, single buffered']
    %7 = vsyncpa [#allocation3], 0
    %8 = vsyncpa [#allocation6], 0
    %9 = vsyncpa [#allocation4], 0
    // Predicated region
    $region2: #{tpu_custom_call.1} parent=1 // pred_check
      _
    $region3: #{tpu_custom_call.1} parent=1 // pred_check_branch
      %11 = sbr.rel (0) target = $region5
    $region4: #{tpu_custom_call.1} parent=1 // pred_region
      %s13 = ssub.s32 128, 128
      %14 = vsyncadd [#allocation3], %s13
      %s16 = sshll.u32 [#allocation2], 4
      %s17 = int_to_ptr.vmem [resolvable:$true] %s16
      %19 = dma.hbm_to_vmem [thread:$0]  %s0, 128, %s17, [#allocation3]
    $region5: #{tpu_custom_call.1} parent=1 // pred_fallthru
      _
    // Predicated region
    $region6: #{tpu_custom_call.1} parent=1 // pred_check
      _
    $region7: #{tpu_custom_call.1} parent=1 // pred_check_branch
      %21 = sbr.rel (0) target = $region9
    $region8: #{tpu_custom_call.1} parent=1 // pred_region
      %s23 = ssub.s32 128, 128
      %24 = vsyncadd [#allocation6], %s23
      %s26 = sshll.u32 [#allocation5], 4
      %s27 = int_to_ptr.vmem [resolvable:$true] %s26
      %29 = dma.hbm_to_vmem [thread:$0]  %s1, 128, %s27, [#allocation6]
    $region9: #{tpu_custom_call.1} parent=1 // pred_fallthru
      _
    // Predicated region
    $region10: #{tpu_custom_call.1} parent=1 // pred_check
      _
    $region11: #{tpu_custom_call.1} parent=1 // pred_check_branch
      %31 = sbr.rel (0) target = $region13
    $region12: #{tpu_custom_call.1} parent=1 // pred_region
      %32 = dma.done [#allocation3], 128
    $region13: #{tpu_custom_call.1} parent=1 // pred_fallthru
      _
    // Predicated region
    $region14: #{tpu_custom_call.1} parent=1 // pred_check
      _
    $region15: #{tpu_custom_call.1} parent=1 // pred_check_branch
      %34 = sbr.rel (0) target = $region17
    $region16: #{tpu_custom_call.1} parent=1 // pred_region
      %35 = dma.done [#allocation6], 128
    $region17: #{tpu_custom_call.1} parent=1 // pred_fallthru
      _
    %p36 = scmp.eq.s32.totalorder 0, 0
    // Predicated region
    $region18: #{tpu_custom_call.1} parent=1 // pred_check
      %p37 = pneg %p36
    $region19: #{tpu_custom_call.1} parent=1 // pred_check_branch
      %39 = sbr.rel (%p37) target = $region21
    $region20: #{tpu_custom_call.1} parent=1 // pred_region
      %vm40 = vcmask 57344
      %41 = vst.msk [vmem:[#allocation7] sm:$0x1] %vm40, 0.0
    $region21: #{tpu_custom_call.1} parent=1 // pred_fallthru
      _
    %v42 = vld [vmem:[#allocation2] sm:$0xff]
    %v43 = vld [vmem:[#allocation5] sm:$0xff]
    %v44 = vsub.f32 %v42, %v43
    %v45 = vld [vmem:[#allocation7] sm:$0x1]
    %v46 = vmul.f32 %v44, %v44
    %47 = vadd.xlane.f32.xlu0 %v46
    %v48 = vpop.xlane.xlu0 %47
    %v50 = vlaneseq
    %v51 = vshrl.u32 %v50, 7
    %v52 = vsub.s32 0, %v51
    %v53 = vrot.slane %v48, %v52
    %v54 = vlaneseq
    %v55 = vshrl.u32 %v54, 7
    %v56 = vsub.s32 1, %v55
    %v57 = vrot.slane %v48, %v56
    %v58 = vlaneseq
    %v59 = vshrl.u32 %v58, 7
    %v60 = vsub.s32 2, %v59
    %v61 = vrot.slane %v48, %v60
    %v62 = vlaneseq
    %v63 = vshrl.u32 %v62, 7
    %v64 = vsub.s32 3, %v63
    %v65 = vrot.slane %v48, %v64
    %v66 = vlaneseq
    %v67 = vshrl.u32 %v66, 7
    %v68 = vsub.s32 4, %v67
    %v69 = vrot.slane %v48, %v68
    %v70 = vlaneseq
    %v71 = vshrl.u32 %v70, 7
    %v72 = vsub.s32 5, %v71
    %v73 = vrot.slane %v48, %v72
    %v74 = vlaneseq
    %v75 = vshrl.u32 %v74, 7
    %v76 = vsub.s32 6, %v75
    %v77 = vrot.slane %v48, %v76
    %v78 = vlaneseq
    %v79 = vshrl.u32 %v78, 7
    %v80 = vsub.s32 7, %v79
    %v81 = vrot.slane %v48, %v80
    %v82 = vcombine.low %v53, %v57
    %v83 = vcombine.low %v61, %v65
    %v84 = vcombine.low %v69, %v73
    %v85 = vcombine.low %v77, %v81
    %v87 = vunpack.c.l.s4 1966171168
    %v88 = vunpack.c.0.s8 %v87
    %v89 = vlaneseq
    %v90 = vshrl.u32 %v89, 7
    %v91 = vsub.s32 %v88, %v90
    %v92 = vrot.slane %v82, %v91
    %v94 = vunpack.c.l.s4 1966171168
    %v95 = vunpack.c.0.s8 %v94
    %v96 = vlaneseq
    %v97 = vshrl.u32 %v96, 7
    %v98 = vsub.s32 %v95, %v97
    %v99 = vrot.slane %v83, %v98
    %v101 = vunpack.c.l.s4 1966171168
    %v102 = vunpack.c.0.s8 %v101
    %v103 = vlaneseq
    %v104 = vshrl.u32 %v103, 7
    %v105 = vsub.s32 %v102, %v104
    %v106 = vrot.slane %v84, %v105
    %v108 = vunpack.c.l.s4 1966171168
    %v109 = vunpack.c.0.s8 %v108
    %v110 = vlaneseq
    %v111 = vshrl.u32 %v110, 7
    %v112 = vsub.s32 %v109, %v111
    %v113 = vrot.slane %v85, %v112
    %v114 = vcombine.low %v92, %v99
    %v115 = vcombine.low %v106, %v113
    %v117 = vunpack.c.l.s4 1966171168
    %v118 = vunpack.c.0.s8 %v117
    %v119 = vlaneseq
    %v120 = vshrl.u32 %v119, 7
    %v121 = vsub.s32 %v118, %v120
    %v122 = vrot.slane %v114, %v121
    %v124 = vunpack.c.l.s4 1966171168
    %v125 = vunpack.c.0.s8 %v124
    %v126 = vlaneseq
    %v127 = vshrl.u32 %v126, 7
    %v128 = vsub.s32 %v125, %v127
    %v129 = vrot.slane %v115, %v128
    %v130 = vcombine.low %v122, %v129
    %131 = vset.pattern.permute.xlu0 0
    %132 = vperm.xlu0 %131, %v130
    %v133 = vpop.permute.xlu0 %132
    %v134 = vlaneseq
    %v135 = vand.u32 %v134, 127
    %v136 = vlaneseq
    %v137 = vshrl.u32 %v136, 7
    %v138 = vsub.s32 %v135, %v137
    %v139 = vrot.slane %v133, %v138
    %v141 = vunpack.c.l.s4 1966171168
    %v142 = vunpack.c.0.s8 %v141
    %v143 = vlaneseq
    %v144 = vshrl.u32 %v143, 7
    %v145 = vsub.s32 %v142, %v144
    %v146 = vrot.slane %v139, %v145
    %v148 = vunpack.c.l.s4 1966171168
    %v149 = vunpack.c.0.s8 %v148
    %v150 = vlaneseq
    %v151 = vshrl.u32 %v150, 7
    %v152 = vsub.s32 %v149, %v151
    %v153 = vrot.slane %v146, %v152
    %v155 = vadd.f32 %v45, %v153
    %vm156 = vcmask 57344
    %157 = vst.msk [vmem:[#allocation7] sm:$0x1] %vm156, %v155
    // Predicated region
    $region22: #{tpu_custom_call.1} parent=1 // pred_check
      _
    $region23: #{tpu_custom_call.1} parent=1 // pred_check_branch
      %159 = sbr.rel (0) target = $region25
    $region24: #{tpu_custom_call.1} parent=1 // pred_region
      %s161 = ssub.s32 16, 16
      %162 = vsyncadd [#allocation4], %s161
      %s164 = sshll.u32 [#allocation7], 4
      %s165 = int_to_ptr.vmem [resolvable:$true] %s164
      %167 = dma.vmem_to_hbm [thread:$0]  %s165, 16, %s2, [#allocation4]
    $region25: #{tpu_custom_call.1} parent=1 // pred_fallthru
      _
    // Predicated region
    $region26: #{tpu_custom_call.1} parent=1 // pred_check
      _
    $region27: #{tpu_custom_call.1} parent=1 // pred_check_branch
      %169 = sbr.rel (0) target = $region29
    $region28: #{tpu_custom_call.1} parent=1 // pred_region
      %170 = dma.done [#allocation4], 16
    $region29: #{tpu_custom_call.1} parent=1 // pred_fallthru
      _
    %171 = vsyncpa [#allocation3], 1
    %172 = vsyncpa [#allocation6], 1
    %173 = vsyncpa [#allocation4], 1

</llo_original>
